<compile_context>
chip_gen: v6e
topology: v6e:2x2x1
jax: 0.10.0
libtpu: 0.0.40
codegen_flags: <defaults>
</compile_context>

<pallas_src>
import jax
import jax.numpy as jnp
from jax.experimental import pallas as pl
from jax.experimental.pallas import tpu as pltpu


def mlp_msp_kernel(x1_ref, x2_ref, w1a_ref, w1b_ref, b1_ref, w2_ref, b2_ref, o_ref):
    # fc1 without the concat: h = x1 @ W1[:2H] + x2 @ W1[2H:] + b1
    h = jnp.dot(x1_ref[...], w1a_ref[...], preferred_element_type=jnp.float32)
    h = h + jnp.dot(x2_ref[...], w1b_ref[...], preferred_element_type=jnp.float32)
    h = h + b1_ref[...]                         # broadcast [1, 4H]
    h = jnp.maximum(h, 0.0)                     # ReLU (f32 on the VPU)

    # TODO(synk): dropout(p=0.25) is identity in eval mode; training-mode masking
    # (pltpu.prng_seed / prng_random_bits) is not implemented here.

    # fc2: output width is 1, so use a lane reduction instead of an MXU matmul.
    out = jnp.sum(h * w2_ref[...], axis=-1) + b2_ref[0]          # (TM,)
    o_ref[...] = out.reshape(o_ref.shape).astype(o_ref.dtype)    # lane-dense [1,1,TM]


def _round_up(x, m):
    return ((x + m - 1) // m) * m


def mlp_msp_forward(input1, input2, w1, b1, w2, b2, *, tm=512):
    """input1, input2: [N, 2H] float32. Returns [N] float32 (== x.view(-1))."""
    N, two_h = input1.shape
    four_h = two_h * 2
    assert input2.shape == (N, two_h)
    assert w1.shape == (four_h, four_h)
    assert b1.shape == (four_h,)
    assert w2.shape == (four_h, 1)
    assert b2.shape == (1,)

    # Clamp the tile so small batches don't pay for a huge padded tile, while
    # keeping TM a multiple of 128 (lane-dense stores) and of 8 (sublane rule).
    tm = min(tm, _round_up(max(N, 1), 128))
    tm = max(128, _round_up(tm, 128))

    # Pad batch up to a multiple of the tile size (ragged last tile handled here).
    num_tiles = pl.cdiv(N, tm)
    n_pad = num_tiles * tm
    if n_pad != N:
        pad = ((0, n_pad - N), (0, 0))
        input1 = jnp.pad(input1, pad)
        input2 = jnp.pad(input2, pad)

    # Split fc1 weight into the two row blocks that multiply input1 / input2.
    w1a = w1[:two_h, :]
    w1b = w1[two_h:, :]
    b1_row = b1.reshape(1, four_h)
    w2_row = w2.reshape(1, four_h)   # column vector flattened to a row
    b2_s = b2.reshape(1)             # scalar -> SMEM

    out = pl.pallas_call(
        mlp_msp_kernel,
        out_shape=jax.ShapeDtypeStruct((num_tiles, 1, tm), jnp.float32),
        grid_spec=pltpu.PrefetchScalarGridSpec(
            num_scalar_prefetch=0,
            grid=(num_tiles,),
            in_specs=[
                # streamed input tiles
                pl.BlockSpec((tm, two_h), lambda i: (i, 0)),        # input1
                pl.BlockSpec((tm, two_h), lambda i: (i, 0)),        # input2
                # resident weights / biases (constant index_map -> fetched once)
                pl.BlockSpec((two_h, four_h), lambda i: (0, 0)),    # W1a
                pl.BlockSpec((two_h, four_h), lambda i: (0, 0)),    # W1b
                pl.BlockSpec((1, four_h), lambda i: (0, 0)),        # b1 row
                pl.BlockSpec((1, four_h), lambda i: (0, 0)),        # w2 row
                pl.BlockSpec(memory_space=pltpu.MemorySpace.SMEM),  # b2 scalar
            ],
            out_specs=pl.BlockSpec((1, 1, tm), lambda i: (i, 0, 0)),
        ),
        compiler_params=pltpu.CompilerParams(
            dimension_semantics=("parallel",),
        ),
    )(input1, input2, w1a, w1b, b1_row, w2_row, b2_s)

    return out.reshape(-1)[:N]


def reference_forward(input1, input2, w1, b1, w2, b2):
    x = jnp.concatenate([input1, input2], axis=1)
    h = jnp.maximum(x @ w1 + b1, 0.0)
    return (h @ w2 + b2).reshape(-1)


if __name__ == "__main__":
    hidden_dim = 32
    two_h = hidden_dim * 2
    four_h = hidden_dim * 4

    key = jax.random.PRNGKey(0)
    k1, k2, k3, k4, k5, k6, k7, k8 = jax.random.split(key, 8)

    # Deterministic synthetic parameters (nn.Linear shapes, weights stored so
    # that y = x @ w + b matches PyTorch's x @ W.T + b after transposition).
    w1 = jax.random.normal(k3, (four_h, four_h), dtype=jnp.float32) * 0.05
    b1 = jax.random.normal(k4, (four_h,), dtype=jnp.float32) * 0.05
    w2 = jax.random.normal(k5, (four_h, 1), dtype=jnp.float32) * 0.05
    b2 = jax.random.normal(k6, (1,), dtype=jnp.float32) * 0.05

    # Small test: single (padded) tile.
    N = 8
    input1 = jax.random.normal(k1, (N, two_h), dtype=jnp.float32)
    input2 = jax.random.normal(k2, (N, two_h), dtype=jnp.float32)
    out = jax.block_until_ready(mlp_msp_forward(input1, input2, w1, b1, w2, b2))
    ref = reference_forward(input1, input2, w1, b1, w2, b2)
    assert out.shape == (N,)
    assert jnp.allclose(out, ref, atol=1e-4, rtol=1e-4), (out, ref)

    # Multi-tile test with a ragged last tile (exercises grid + padding path).
    N2 = 300
    i1 = jax.random.normal(k7, (N2, two_h), dtype=jnp.float32)
    i2 = jax.random.normal(k8, (N2, two_h), dtype=jnp.float32)
    out2 = jax.block_until_ready(mlp_msp_forward(i1, i2, w1, b1, w2, b2, tm=128))
    ref2 = reference_forward(i1, i2, w1, b1, w2, b2)
    assert out2.shape == (N2,)
    assert jnp.allclose(out2, ref2, atol=1e-4, rtol=1e-4), (out2, ref2)

    # Larger test exercising the default (bigger) tile size and multiple tiles.
    N3 = 1500
    i3 = jax.random.normal(k7, (N3, two_h), dtype=jnp.float32)
    i4 = jax.random.normal(k8, (N3, two_h), dtype=jnp.float32)
    out3 = jax.block_until_ready(mlp_msp_forward(i3, i4, w1, b1, w2, b2))
    ref3 = reference_forward(i3, i4, w1, b1, w2, b2)
    assert out3.shape == (N3,)
    assert jnp.allclose(out3, ref3, atol=1e-4, rtol=1e-4), (out3, ref3)

    print("KERNEL_OK")
</pallas_src>

<mosaic_0001>
module attributes {stable_mosaic.version = 11 : i64} {
  func.func @mlp_msp_kernel(%arg0: i32, %arg1: memref<128x64xf32, #tpu.memory_space<vmem>>, %arg2: memref<128x64xf32, #tpu.memory_space<vmem>>, %arg3: memref<64x128xf32, #tpu.memory_space<vmem>>, %arg4: memref<64x128xf32, #tpu.memory_space<vmem>>, %arg5: memref<1x128xf32, #tpu.memory_space<vmem>>, %arg6: memref<1x128xf32, #tpu.memory_space<vmem>>, %arg7: memref<1xf32, #tpu.memory_space<smem>>, %arg8: memref<1x1x128xf32, #tpu.memory_space<vmem>>) attributes {dimension_semantics = [#tpu.dimension_semantics<parallel>], iteration_bounds = array<i64: 1>, scalar_prefetch = 0 : i64, scratch_operands = 0 : i64, tpu.core_type = #tpu.core_type<tc>, window_params = [{transform_indices = @transform_0, window_bounds = array<i64: 128, 64>}, {transform_indices = @transform_1, window_bounds = array<i64: 128, 64>}, {pipeline_mode = #tpu.pipeline_mode<synchronous>, transform_indices = @transform_2, window_bounds = array<i64: 64, 128>}, {pipeline_mode = #tpu.pipeline_mode<synchronous>, transform_indices = @transform_3, window_bounds = array<i64: 64, 128>}, {pipeline_mode = #tpu.pipeline_mode<synchronous>, transform_indices = @transform_4, window_bounds = array<i64: 1, 128>}, {pipeline_mode = #tpu.pipeline_mode<synchronous>, transform_indices = @transform_5, window_bounds = array<i64: 1, 128>}, {transform_indices = @transform_6, window_bounds = array<i64: 1>}, {transform_indices = @transform_7, window_bounds = array<i64: 1, 1, 128>}]} {
    %c0 = arith.constant 0 : index
    %c0_0 = arith.constant 0 : index
    %0 = vector.load %arg1[%c0, %c0_0] : memref<128x64xf32, #tpu.memory_space<vmem>>, vector<128x64xf32>
    %c0_1 = arith.constant 0 : index
    %c0_2 = arith.constant 0 : index
    %1 = vector.load %arg3[%c0_1, %c0_2] : memref<64x128xf32, #tpu.memory_space<vmem>>, vector<64x128xf32>
    %cst = arith.constant dense<0.000000e+00> : vector<128x128xf32>
    %2 = tpu.matmul %0, %1, %cst {dimension_numbers = #tpu.dot_dimension_numbers<[1], [0], [0], [1], [0, 0, 1, 1], [], []>} : vector<128x64xf32>, vector<64x128xf32>, vector<128x128xf32> -> vector<128x128xf32>
    %c0_3 = arith.constant 0 : index
    %c0_4 = arith.constant 0 : index
    %3 = vector.load %arg2[%c0_3, %c0_4] : memref<128x64xf32, #tpu.memory_space<vmem>>, vector<128x64xf32>
    %c0_5 = arith.constant 0 : index
    %c0_6 = arith.constant 0 : index
    %4 = vector.load %arg4[%c0_5, %c0_6] : memref<64x128xf32, #tpu.memory_space<vmem>>, vector<64x128xf32>
    %cst_7 = arith.constant dense<0.000000e+00> : vector<128x128xf32>
    %5 = tpu.matmul %3, %4, %cst_7 {dimension_numbers = #tpu.dot_dimension_numbers<[1], [0], [0], [1], [0, 0, 1, 1], [], []>} : vector<128x64xf32>, vector<64x128xf32>, vector<128x128xf32> -> vector<128x128xf32>
    %6 = arith.addf %2, %5 : vector<128x128xf32>
    %c0_8 = arith.constant 0 : index
    %c0_9 = arith.constant 0 : index
    %7 = vector.load %arg5[%c0_8, %c0_9] : memref<1x128xf32, #tpu.memory_space<vmem>>, vector<1x128xf32>
    %8 = vector.broadcast %7 : vector<1x128xf32> to vector<128x128xf32>
    %9 = arith.addf %6, %8 : vector<128x128xf32>
    %cst_10 = arith.constant 0.000000e+00 : f32
    %10 = vector.broadcast %cst_10 : f32 to vector<128x128xf32>
    %11 = arith.maximumf %9, %10 : vector<128x128xf32>
    %c0_11 = arith.constant 0 : index
    %c0_12 = arith.constant 0 : index
    %12 = vector.load %arg6[%c0_11, %c0_12] : memref<1x128xf32, #tpu.memory_space<vmem>>, vector<1x128xf32>
    %13 = vector.broadcast %12 : vector<1x128xf32> to vector<128x128xf32>
    %14 = arith.mulf %11, %13 : vector<128x128xf32>
    %cst_13 = arith.constant dense<0.000000e+00> : vector<128xf32>
    %15 = vector.multi_reduction <add>, %14, %cst_13 [1] : vector<128x128xf32> to vector<128xf32>
    %c0_14 = arith.constant 0 : index
    %16 = memref.load %arg7[%c0_14] : memref<1xf32, #tpu.memory_space<smem>>
    %17 = vector.broadcast %16 : f32 to vector<128xf32>
    %18 = arith.addf %15, %17 : vector<128xf32>
    %19 = vector.shape_cast %18 : vector<128xf32> to vector<1x1x128xf32>
    %c0_15 = arith.constant 0 : index
    %c0_16 = arith.constant 0 : index
    %c0_17 = arith.constant 0 : index
    %20 = vector.load %arg8[%c0_15, %c0_16, %c0_17] : memref<1x1x128xf32, #tpu.memory_space<vmem>>, vector<1x1x128xf32>
    tpu.vector_store %arg8[%c0_15, %c0_16, %c0_17], %19 {strides = array<i32>} : memref<1x1x128xf32, #tpu.memory_space<vmem>>, vector<1x1x128xf32>,
    return
  }
  func.func @transform_0(%arg0: i32) -> (i32, i32) {
    %c0_i32 = arith.constant 0 : i32
    %c0_i32_0 = arith.constant 0 : i32
    return %arg0, %c0_i32 : i32, i32
  }
  func.func @transform_1(%arg0: i32) -> (i32, i32) {
    %c0_i32 = arith.constant 0 : i32
    %c0_i32_0 = arith.constant 0 : i32
    return %arg0, %c0_i32 : i32, i32
  }
  func.func @transform_2(%arg0: i32) -> (i32, i32) {
    %c0_i32 = arith.constant 0 : i32
    %c0_i32_0 = arith.constant 0 : i32
    %c0_i32_1 = arith.constant 0 : i32
    return %c0_i32, %c0_i32_0 : i32, i32
  }
  func.func @transform_3(%arg0: i32) -> (i32, i32) {
    %c0_i32 = arith.constant 0 : i32
    %c0_i32_0 = arith.constant 0 : i32
    %c0_i32_1 = arith.constant 0 : i32
    return %c0_i32, %c0_i32_0 : i32, i32
  }
  func.func @transform_4(%arg0: i32) -> (i32, i32) {
    %c0_i32 = arith.constant 0 : i32
    %c0_i32_0 = arith.constant 0 : i32
    %c0_i32_1 = arith.constant 0 : i32
    return %c0_i32, %c0_i32_0 : i32, i32
  }
  func.func @transform_5(%arg0: i32) -> (i32, i32) {
    %c0_i32 = arith.constant 0 : i32
    %c0_i32_0 = arith.constant 0 : i32
    %c0_i32_1 = arith.constant 0 : i32
    return %c0_i32, %c0_i32_0 : i32, i32
  }
  func.func @transform_6(%arg0: i32) -> i32 {
    %c0_i32 = arith.constant 0 : i32
    %c0_i32_0 = arith.constant 0 : i32
    return %c0_i32 : i32
  }
  func.func @transform_7(%arg0: i32) -> (i32, i32, i32) {
    %c0_i32 = arith.constant 0 : i32
    %c0_i32_0 = arith.constant 0 : i32
    %c0_i32_1 = arith.constant 0 : i32
    return %arg0, %c0_i32, %c0_i32_0 : i32, i32, i32
  }
}

</mosaic_0001>

<llo_original>
// kernel: tpu_custom_call.1
$region0: #{tpu_custom_call.1}
  #allocation0 [shape = 'u32[]', space=smem, size = 0x4, offset = 0x4, fixed_abs, tag = 'smem constant byte address 0x4 - core index']
  #allocation1 [shape = 'u32[144,128]{1,0:T(1,128)}', space=vmem, size = 0x12000, scoped, tag = 'internal scratch']
  #allocation2 [shape = 'f32[1]{0:T(128)S(6)}', space=smem, size = 0x200, scoped, tag = 'scoped memory for tpu_custom_call.1']
  %s0 = inlined_call_operand.vmem [shape: f32[128,64], index: 0, kind: input, shape index: {}]
  %s1 = inlined_call_operand.vmem [shape: f32[128,64], index: 1, kind: input, shape index: {}]
  %s2 = inlined_call_operand.vmem [shape: f32[64,128], index: 2, kind: input, shape index: {}]
  %s3 = inlined_call_operand.vmem [shape: f32[64,128], index: 3, kind: input, shape index: {}]
  %s4 = inlined_call_operand.vmem [shape: f32[1,128], index: 4, kind: input, shape index: {}]
  %s5 = inlined_call_operand.vmem [shape: f32[1,128], index: 5, kind: input, shape index: {}]
  %s6 = inlined_call_operand.<no memory space> [shape: f32[1], index: 6, kind: input, shape index: {}]
  %s7 = inlined_call_operand.hbm [shape: f32[1,1,128], index: 7, kind: output, shape index: {}]
  %s8 = sld [smem:[#allocation0]]
  $region38: #{tpu_custom_call.1} parent=0
    _
  %s10 = ssub.s32 1, %s8
  %s11 = scalar_select 0, %s10, %s8
  %12 = sst [smem:[#allocation2]] %s6
  $region1: #{tpu_custom_call.1} parent=0
    #allocation3 [shape = 'u8[512]{0}', space=vmem, size = 0x400, scoped, tag = 'output window, operand 0, single buffered']
    #allocation4 [shape = 's32[1]{0}', space=sflag, size = 0x4, scoped, tag = 'scoped memory for tpu_custom_call.1']
    %13 = vsyncpa [#allocation4], 0
    // Predicated region
    $region2: #{tpu_custom_call.1} parent=1 // pred_check
      _
    $region3: #{tpu_custom_call.1} parent=1 // pred_check_branch
      %15 = sbr.rel (0) target = $region5
    $region4: #{tpu_custom_call.1} parent=1 // pred_region
      _
    $region5: #{tpu_custom_call.1} parent=1 // pred_fallthru
      _
    // Predicated region
    $region6: #{tpu_custom_call.1} parent=1 // pred_check
      _
    $region7: #{tpu_custom_call.1} parent=1 // pred_check_branch
      %17 = sbr.rel (0) target = $region9
    $region8: #{tpu_custom_call.1} parent=1 // pred_region
      _
    $region9: #{tpu_custom_call.1} parent=1 // pred_fallthru
      _
    // Predicated region
    $region10: #{tpu_custom_call.1} parent=1 // pred_check
      _
    $region11: #{tpu_custom_call.1} parent=1 // pred_check_branch
      %19 = sbr.rel (0) target = $region13
    $region12: #{tpu_custom_call.1} parent=1 // pred_region
      _
    $region13: #{tpu_custom_call.1} parent=1 // pred_fallthru
      _
    // Predicated region
    $region14: #{tpu_custom_call.1} parent=1 // pred_check
      _
    $region15: #{tpu_custom_call.1} parent=1 // pred_check_branch
      %21 = sbr.rel (0) target = $region17
    $region16: #{tpu_custom_call.1} parent=1 // pred_region
      _
    $region17: #{tpu_custom_call.1} parent=1 // pred_fallthru
      _
    // Predicated region
    $region18: #{tpu_custom_call.1} parent=1 // pred_check
      _
    $region19: #{tpu_custom_call.1} parent=1 // pred_check_branch
      %23 = sbr.rel (0) target = $region21
    $region20: #{tpu_custom_call.1} parent=1 // pred_region
      _
    $region21: #{tpu_custom_call.1} parent=1 // pred_fallthru
      _
    // Predicated region
    $region22: #{tpu_custom_call.1} parent=1 // pred_check
      _
    $region23: #{tpu_custom_call.1} parent=1 // pred_check_branch
      %25 = sbr.rel (0) target = $region25
    $region24: #{tpu_custom_call.1} parent=1 // pred_region
      _
    $region25: #{tpu_custom_call.1} parent=1 // pred_fallthru
      _
    // Predicated region
    $region26: #{tpu_custom_call.1} parent=1 // pred_check
      _
    $region27: #{tpu_custom_call.1} parent=1 // pred_check_branch
      %27 = sbr.rel (0) target = $region29
    $region28: #{tpu_custom_call.1} parent=1 // pred_region
      _
    $region29: #{tpu_custom_call.1} parent=1 // pred_fallthru
      _
    %v28 = vld [vmem:[%s0] sm:$0xff]
    %v29 = vld [vmem:[%s0 + $0x8] sm:$0xff]
    %v30 = vld [vmem:[%s0 + $0x10] sm:$0xff]
    %v31 = vld [vmem:[%s0 + $0x18] sm:$0xff]
    %v32 = vld [vmem:[%s0 + $0x20] sm:$0xff]
    %v33 = vld [vmem:[%s0 + $0x28] sm:$0xff]
    %v34 = vld [vmem:[%s0 + $0x30] sm:$0xff]
    %v35 = vld [vmem:[%s0 + $0x38] sm:$0xff]
    %v36 = vld [vmem:[%s0 + $0x40] sm:$0xff]
    %v37 = vld [vmem:[%s0 + $0x48] sm:$0xff]
    %v38 = vld [vmem:[%s0 + $0x50] sm:$0xff]
    %v39 = vld [vmem:[%s0 + $0x58] sm:$0xff]
    %v40 = vld [vmem:[%s0 + $0x60] sm:$0xff]
    %v41 = vld [vmem:[%s0 + $0x68] sm:$0xff]
    %v42 = vld [vmem:[%s0 + $0x70] sm:$0xff]
    %v43 = vld [vmem:[%s0 + $0x78] sm:$0xff]
    %v44 = vld [vmem:[%s2] sm:$0xff]
    %v45 = vld [vmem:[%s2 + $0x8] sm:$0xff]
    %v46 = vld [vmem:[%s2 + $0x10] sm:$0xff]
    %v47 = vld [vmem:[%s2 + $0x18] sm:$0xff]
    %v48 = vld [vmem:[%s2 + $0x20] sm:$0xff]
    %v49 = vld [vmem:[%s2 + $0x28] sm:$0xff]
    %v50 = vld [vmem:[%s2 + $0x30] sm:$0xff]
    %v51 = vld [vmem:[%s2 + $0x38] sm:$0xff]
    %v52 = vld [vmem:[%s1] sm:$0xff]
    %v53 = vld [vmem:[%s1 + $0x8] sm:$0xff]
    %v54 = vld [vmem:[%s1 + $0x10] sm:$0xff]
    %v55 = vld [vmem:[%s1 + $0x18] sm:$0xff]
    %v56 = vld [vmem:[%s1 + $0x20] sm:$0xff]
    %v57 = vld [vmem:[%s1 + $0x28] sm:$0xff]
    %v58 = vld [vmem:[%s1 + $0x30] sm:$0xff]
    %v59 = vld [vmem:[%s1 + $0x38] sm:$0xff]
    %v60 = vld [vmem:[%s1 + $0x40] sm:$0xff]
    %v61 = vld [vmem:[%s1 + $0x48] sm:$0xff]
    %v62 = vld [vmem:[%s1 + $0x50] sm:$0xff]
    %v63 = vld [vmem:[%s1 + $0x58] sm:$0xff]
    %v64 = vld [vmem:[%s1 + $0x60] sm:$0xff]
    %v65 = vld [vmem:[%s1 + $0x68] sm:$0xff]
    %v66 = vld [vmem:[%s1 + $0x70] sm:$0xff]
    %v67 = vld [vmem:[%s1 + $0x78] sm:$0xff]
    %v68 = vld [vmem:[%s3] sm:$0xff]
    %v69 = vld [vmem:[%s3 + $0x8] sm:$0xff]
    %v70 = vld [vmem:[%s3 + $0x10] sm:$0xff]
    %v71 = vld [vmem:[%s3 + $0x18] sm:$0xff]
    %v72 = vld [vmem:[%s3 + $0x20] sm:$0xff]
    %v73 = vld [vmem:[%s3 + $0x28] sm:$0xff]
    %v74 = vld [vmem:[%s3 + $0x30] sm:$0xff]
    %v75 = vld [vmem:[%s3 + $0x38] sm:$0xff]
    %vm76 = vcmask 523264
    %v78 = vsel %vm76, %v52, 0
    %v81 = vsel %vm76, %v53, 0
    %v84 = vsel %vm76, %v54, 0
    %v87 = vsel %vm76, %v55, 0
    %v90 = vsel %vm76, %v56, 0
    %v93 = vsel %vm76, %v57, 0
    %v96 = vsel %vm76, %v58, 0
    %v99 = vsel %vm76, %v59, 0
    %v102 = vsel %vm76, %v60, 0
    %v105 = vsel %vm76, %v61, 0
    %v108 = vsel %vm76, %v62, 0
    %v111 = vsel %vm76, %v63, 0
    %v114 = vsel %vm76, %v64, 0
    %v117 = vsel %vm76, %v65, 0
    %v120 = vsel %vm76, %v66, 0
    %v123 = vsel %vm76, %v67, 0
    %125 = vmatprep.subr.mxu0 0.0
    %126 = vmatpush1.msra.mxu0 0.0
    %127 = vmatprep.subr.mxu0 0.0
    %128 = vmatpush1.msra.mxu0 0.0
    %129 = vmatprep.subr.mxu0 0.0
    %130 = vmatpush1.msra.mxu0 0.0
    %131 = vmatprep.subr.mxu0 0.0
    %132 = vmatpush1.msra.mxu0 0.0
    %133 = vmatprep.subr.mxu0 0.0
    %134 = vmatpush1.msra.mxu0 0.0
    %135 = vmatprep.subr.mxu0 0.0
    %136 = vmatpush1.msra.mxu0 0.0
    %137 = vmatprep.subr.mxu0 0.0
    %138 = vmatpush1.msra.mxu0 0.0
    %139 = vmatprep.subr.mxu0 0.0
    %140 = vmatpush1.msra.mxu0 0.0
    %141 = vmatprep.subr.mxu0 0.0
    %142 = vmatpush1.msra.mxu0 %v75
    %143 = vmatprep.subr.mxu0 0.0
    %144 = vmatpush1.msra.mxu0 %v74
    %145 = vmatprep.subr.mxu0 0.0
    %146 = vmatpush1.msra.mxu0 %v73
    %147 = vmatprep.subr.mxu0 0.0
    %148 = vmatpush1.msra.mxu0 %v72
    %149 = vmatprep.subr.mxu0 0.0
    %150 = vmatpush1.msra.mxu0 %v71
    %151 = vmatprep.subr.mxu0 0.0
    %152 = vmatpush1.msra.mxu0 %v70
    %153 = vmatprep.subr.mxu0 0.0
    %154 = vmatpush1.msra.mxu0 %v69
    %155 = vmatprep.subr.mxu0 0.0
    %156 = vmatpush1.msra.mxu0 %v68
    %157 = vmatprep.subr.mxu0 0.0
    %158 = vmatpush2.msra.mxu0 0.0
    %159 = vmatprep.subr.mxu0 0.0
    %160 = vmatpush2.msra.mxu0 0.0
    %161 = vmatprep.subr.mxu0 0.0
    %162 = vmatpush2.msra.mxu0 0.0
    %163 = vmatprep.subr.mxu0 0.0
    %164 = vmatpush2.msra.mxu0 0.0
    %165 = vmatprep.subr.mxu0 0.0
    %166 = vmatpush2.msra.mxu0 0.0
    %167 = vmatprep.subr.mxu0 0.0
    %168 = vmatpush2.msra.mxu0 0.0
    %169 = vmatprep.subr.mxu0 0.0
    %170 = vmatpush2.msra.mxu0 0.0
    %171 = vmatprep.subr.mxu0 0.0
    %172 = vmatpush2.msra.mxu0 0.0
    %173 = vmatprep.subr.mxu0 0.0
    %174 = vmatpush2.msra.mxu0 0.0
    %175 = vmatprep.subr.mxu0 0.0
    %176 = vmatpush2.msra.mxu0 0.0
    %177 = vmatprep.subr.mxu0 0.0
    %178 = vmatpush2.msra.mxu0 0.0
    %179 = vmatprep.subr.mxu0 0.0
    %180 = vmatpush2.msra.mxu0 0.0
    %181 = vmatprep.subr.mxu0 0.0
    %182 = vmatpush2.msra.mxu0 0.0
    %183 = vmatprep.subr.mxu0 0.0
    %184 = vmatpush2.msra.mxu0 0.0
    %185 = vmatprep.subr.mxu0 0.0
    %186 = vmatpush2.msra.mxu0 0.0
    %187 = vmatprep.subr.mxu0 0.0
    %188 = vmatpush2.msra.mxu0 0.0
    %189 = vmatprep.mubr.f32.mxu0 0.0
    %190 = vmatmul.mubr.f32.gmra.mxu0 %v78
    %v191 = vpop.f32.mrf.mxu0
    %v192 = vadd.f32 0.0, %v191
    %v193 = vpop.f32.mrf.mxu0
    %194 = vmatprep.mubr.f32.mxu0 0.0
    %195 = vmatmul.mubr.f32.gmra.mxu0 %v81
    %v196 = vpop.f32.mrf.mxu0
    %v197 = vadd.f32 0.0, %v196
    %v198 = vpop.f32.mrf.mxu0
    %199 = vmatprep.mubr.f32.mxu0 0.0
    %200 = vmatmul.mubr.f32.gmra.mxu0 %v84
    %v201 = vpop.f32.mrf.mxu0
    %v202 = vadd.f32 0.0, %v201
    %v203 = vpop.f32.mrf.mxu0
    %204 = vmatprep.mubr.f32.mxu0 0.0
    %205 = vmatmul.mubr.f32.gmra.mxu0 %v87
    %v206 = vpop.f32.mrf.mxu0
    %v207 = vadd.f32 0.0, %v206
    %v208 = vpop.f32.mrf.mxu0
    %209 = vmatprep.mubr.f32.mxu0 0.0
    %210 = vmatmul.mubr.f32.gmra.mxu0 %v90
    %v211 = vpop.f32.mrf.mxu0
    %v212 = vadd.f32 0.0, %v211
    %v213 = vpop.f32.mrf.mxu0
    %214 = vmatprep.mubr.f32.mxu0 0.0
    %215 = vmatmul.mubr.f32.gmra.mxu0 %v93
    %v216 = vpop.f32.mrf.mxu0
    %v217 = vadd.f32 0.0, %v216
    %v218 = vpop.f32.mrf.mxu0
    %219 = vmatprep.mubr.f32.mxu0 0.0
    %220 = vmatmul.mubr.f32.gmra.mxu0 %v96
    %v221 = vpop.f32.mrf.mxu0
    %v222 = vadd.f32 0.0, %v221
    %v223 = vpop.f32.mrf.mxu0
    %224 = vmatprep.mubr.f32.mxu0 0.0
    %225 = vmatmul.mubr.f32.gmra.mxu0 %v99
    %v226 = vpop.f32.mrf.mxu0
    %v227 = vadd.f32 0.0, %v226
    %v228 = vpop.f32.mrf.mxu0
    %229 = vmatprep.mubr.f32.mxu0 0.0
    %230 = vmatmul.mubr.f32.gmra.mxu0 %v102
    %v231 = vpop.f32.mrf.mxu0
    %v232 = vadd.f32 0.0, %v231
    %v233 = vpop.f32.mrf.mxu0
    %234 = vmatprep.mubr.f32.mxu0 0.0
    %235 = vmatmul.mubr.f32.gmra.mxu0 %v105
    %v236 = vpop.f32.mrf.mxu0
    %v237 = vadd.f32 0.0, %v236
    %v238 = vpop.f32.mrf.mxu0
    %239 = vmatprep.mubr.f32.mxu0 0.0
    %240 = vmatmul.mubr.f32.gmra.mxu0 %v108
    %v241 = vpop.f32.mrf.mxu0
    %v242 = vadd.f32 0.0, %v241
    %v243 = vpop.f32.mrf.mxu0
    %244 = vmatprep.mubr.f32.mxu0 0.0
    %245 = vmatmul.mubr.f32.gmra.mxu0 %v111
    %v246 = vpop.f32.mrf.mxu0
    %v247 = vadd.f32 0.0, %v246
    %v248 = vpop.f32.mrf.mxu0
    %249 = vmatprep.mubr.f32.mxu0 0.0
    %250 = vmatmul.mubr.f32.gmra.mxu0 %v114
    %v251 = vpop.f32.mrf.mxu0
    %v252 = vadd.f32 0.0, %v251
    %v253 = vpop.f32.mrf.mxu0
    %254 = vmatprep.mubr.f32.mxu0 0.0
    %255 = vmatmul.mubr.f32.gmra.mxu0 %v117
    %v256 = vpop.f32.mrf.mxu0
    %v257 = vadd.f32 0.0, %v256
    %v258 = vpop.f32.mrf.mxu0
    %259 = vmatprep.mubr.f32.mxu0 0.0
    %260 = vmatmul.mubr.f32.gmra.mxu0 %v120
    %v261 = vpop.f32.mrf.mxu0
    %v262 = vadd.f32 0.0, %v261
    %v263 = vpop.f32.mrf.mxu0
    %264 = vmatprep.mubr.f32.mxu0 0.0
    %265 = vmatmul.mubr.f32.gmra.mxu0 %v123
    %v266 = vpop.f32.mrf.mxu0
    %v267 = vadd.f32 0.0, %v266
    %v268 = vpop.f32.mrf.mxu0
    %269 = vdwg.mxu0
    %v271 = vsel %vm76, %v28, 0
    %v274 = vsel %vm76, %v29, 0
    %v277 = vsel %vm76, %v30, 0
    %v280 = vsel %vm76, %v31, 0
    %v283 = vsel %vm76, %v32, 0
    %v286 = vsel %vm76, %v33, 0
    %v289 = vsel %vm76, %v34, 0
    %v292 = vsel %vm76, %v35, 0
    %v295 = vsel %vm76, %v36, 0
    %v298 = vsel %vm76, %v37, 0
    %v301 = vsel %vm76, %v38, 0
    %v304 = vsel %vm76, %v39, 0
    %v307 = vsel %vm76, %v40, 0
    %v310 = vsel %vm76, %v41, 0
    %v313 = vsel %vm76, %v42, 0
    %v316 = vsel %vm76, %v43, 0
    %318 = vmatprep.subr.mxu0 0.0
    %319 = vmatpush1.msra.mxu0 0.0
    %320 = vmatprep.subr.mxu0 0.0
    %321 = vmatpush1.msra.mxu0 0.0
    %322 = vmatprep.subr.mxu0 0.0
    %323 = vmatpush1.msra.mxu0 0.0
    %324 = vmatprep.subr.mxu0 0.0
    %325 = vmatpush1.msra.mxu0 0.0
    %326 = vmatprep.subr.mxu0 0.0
    %327 = vmatpush1.msra.mxu0 0.0
    %328 = vmatprep.subr.mxu0 0.0
    %329 = vmatpush1.msra.mxu0 0.0
    %330 = vmatprep.subr.mxu0 0.0
    %331 = vmatpush1.msra.mxu0 0.0
    %332 = vmatprep.subr.mxu0 0.0
    %333 = vmatpush1.msra.mxu0 0.0
    %334 = vmatprep.subr.mxu0 0.0
    %335 = vmatpush1.msra.mxu0 %v51
    %336 = vmatprep.subr.mxu0 0.0
    %337 = vmatpush1.msra.mxu0 %v50
    %338 = vmatprep.subr.mxu0 0.0
    %339 = vmatpush1.msra.mxu0 %v49
    %340 = vmatprep.subr.mxu0 0.0
    %341 = vmatpush1.msra.mxu0 %v48
    %342 = vmatprep.subr.mxu0 0.0
    %343 = vmatpush1.msra.mxu0 %v47
    %344 = vmatprep.subr.mxu0 0.0
    %345 = vmatpush1.msra.mxu0 %v46
    %346 = vmatprep.subr.mxu0 0.0
    %347 = vmatpush1.msra.mxu0 %v45
    %348 = vmatprep.subr.mxu0 0.0
    %349 = vmatpush1.msra.mxu0 %v44
    %350 = vmatprep.subr.mxu0 0.0
    %351 = vmatpush2.msra.mxu0 0.0
    %352 = vmatprep.subr.mxu0 0.0
    %353 = vmatpush2.msra.mxu0 0.0
    %354 = vmatprep.subr.mxu0 0.0
    %355 = vmatpush2.msra.mxu0 0.0
    %356 = vmatprep.subr.mxu0 0.0
    %357 = vmatpush2.msra.mxu0 0.0
    %358 = vmatprep.subr.mxu0 0.0
    %359 = vmatpush2.msra.mxu0 0.0
    %360 = vmatprep.subr.mxu0 0.0
    %361 = vmatpush2.msra.mxu0 0.0
    %362 = vmatprep.subr.mxu0 0.0
    %363 = vmatpush2.msra.mxu0 0.0
    %364 = vmatprep.subr.mxu0 0.0
    %365 = vmatpush2.msra.mxu0 0.0
    %366 = vmatprep.subr.mxu0 0.0
    %367 = vmatpush2.msra.mxu0 0.0
    %368 = vmatprep.subr.mxu0 0.0
    %369 = vmatpush2.msra.mxu0 0.0
    %370 = vmatprep.subr.mxu0 0.0
    %371 = vmatpush2.msra.mxu0 0.0
    %372 = vmatprep.subr.mxu0 0.0
    %373 = vmatpush2.msra.mxu0 0.0
    %374 = vmatprep.subr.mxu0 0.0
    %375 = vmatpush2.msra.mxu0 0.0
    %376 = vmatprep.subr.mxu0 0.0
    %377 = vmatpush2.msra.mxu0 0.0
    %378 = vmatprep.subr.mxu0 0.0
    %379 = vmatpush2.msra.mxu0 0.0
    %380 = vmatprep.subr.mxu0 0.0
    %381 = vmatpush2.msra.mxu0 0.0
    %382 = vmatprep.mubr.f32.mxu0 0.0
    %383 = vmatmul.mubr.f32.gmra.mxu0 %v271
    %v384 = vpop.f32.mrf.mxu0
    %v385 = vadd.f32 %v192, %v384
    %v386 = vpop.f32.mrf.mxu0
    %387 = vmatprep.mubr.f32.mxu0 0.0
    %388 = vmatmul.mubr.f32.gmra.mxu0 %v274
    %v389 = vpop.f32.mrf.mxu0
    %v390 = vadd.f32 %v197, %v389
    %v391 = vpop.f32.mrf.mxu0
    %392 = vmatprep.mubr.f32.mxu0 0.0
    %393 = vmatmul.mubr.f32.gmra.mxu0 %v277
    %v394 = vpop.f32.mrf.mxu0
    %v395 = vadd.f32 %v202, %v394
    %v396 = vpop.f32.mrf.mxu0
    %397 = vmatprep.mubr.f32.mxu0 0.0
    %398 = vmatmul.mubr.f32.gmra.mxu0 %v280
    %v399 = vpop.f32.mrf.mxu0
    %v400 = vadd.f32 %v207, %v399
    %v401 = vpop.f32.mrf.mxu0
    %402 = vmatprep.mubr.f32.mxu0 0.0
    %403 = vmatmul.mubr.f32.gmra.mxu0 %v283
    %v404 = vpop.f32.mrf.mxu0
    %v405 = vadd.f32 %v212, %v404
    %v406 = vpop.f32.mrf.mxu0
    %407 = vmatprep.mubr.f32.mxu0 0.0
    %408 = vmatmul.mubr.f32.gmra.mxu0 %v286
    %v409 = vpop.f32.mrf.mxu0
    %v410 = vadd.f32 %v217, %v409
    %v411 = vpop.f32.mrf.mxu0
    %412 = vmatprep.mubr.f32.mxu0 0.0
    %413 = vmatmul.mubr.f32.gmra.mxu0 %v289
    %v414 = vpop.f32.mrf.mxu0
    %v415 = vadd.f32 %v222, %v414
    %v416 = vpop.f32.mrf.mxu0
    %417 = vmatprep.mubr.f32.mxu0 0.0
    %418 = vmatmul.mubr.f32.gmra.mxu0 %v292
    %v419 = vpop.f32.mrf.mxu0
    %v420 = vadd.f32 %v227, %v419
    %v421 = vpop.f32.mrf.mxu0
    %422 = vmatprep.mubr.f32.mxu0 0.0
    %423 = vmatmul.mubr.f32.gmra.mxu0 %v295
    %v424 = vpop.f32.mrf.mxu0
    %v425 = vadd.f32 %v232, %v424
    %v426 = vpop.f32.mrf.mxu0
    %427 = vmatprep.mubr.f32.mxu0 0.0
    %428 = vmatmul.mubr.f32.gmra.mxu0 %v298
    %v429 = vpop.f32.mrf.mxu0
    %v430 = vadd.f32 %v237, %v429
    %v431 = vpop.f32.mrf.mxu0
    %432 = vmatprep.mubr.f32.mxu0 0.0
    %433 = vmatmul.mubr.f32.gmra.mxu0 %v301
    %v434 = vpop.f32.mrf.mxu0
    %v435 = vadd.f32 %v242, %v434
    %v436 = vpop.f32.mrf.mxu0
    %437 = vmatprep.mubr.f32.mxu0 0.0
    %438 = vmatmul.mubr.f32.gmra.mxu0 %v304
    %v439 = vpop.f32.mrf.mxu0
    %v440 = vadd.f32 %v247, %v439
    %v441 = vpop.f32.mrf.mxu0
    %442 = vmatprep.mubr.f32.mxu0 0.0
    %443 = vmatmul.mubr.f32.gmra.mxu0 %v307
    %v444 = vpop.f32.mrf.mxu0
    %v445 = vadd.f32 %v252, %v444
    %v446 = vpop.f32.mrf.mxu0
    %447 = vmatprep.mubr.f32.mxu0 0.0
    %448 = vmatmul.mubr.f32.gmra.mxu0 %v310
    %v449 = vpop.f32.mrf.mxu0
    %v450 = vadd.f32 %v257, %v449
    %v451 = vpop.f32.mrf.mxu0
    %452 = vmatprep.mubr.f32.mxu0 0.0
    %453 = vmatmul.mubr.f32.gmra.mxu0 %v313
    %v454 = vpop.f32.mrf.mxu0
    %v455 = vadd.f32 %v262, %v454
    %v456 = vpop.f32.mrf.mxu0
    %457 = vmatprep.mubr.f32.mxu0 0.0
    %458 = vmatmul.mubr.f32.gmra.mxu0 %v316
    %v459 = vpop.f32.mrf.mxu0
    %v460 = vadd.f32 %v267, %v459
    %v461 = vpop.f32.mrf.mxu0
    %462 = vdwg.mxu0
    %v463 = vld [vmem:[%s4] sm:$0x1]
    %v465 = vlaneseq
    %v466 = vshrl.u32 %v465, 7
    %v467 = vsub.s32 0, %v466
    %v468 = vrot.slane %v463, %v467
    %v470 = vadd.f32 %v385, %v468
    %v471 = vadd.f32 %v390, %v468
    %v472 = vadd.f32 %v395, %v468
    %v473 = vadd.f32 %v400, %v468
    %v474 = vadd.f32 %v405, %v468
    %v475 = vadd.f32 %v410, %v468
    %v476 = vadd.f32 %v415, %v468
    %v477 = vadd.f32 %v420, %v468
    %v478 = vadd.f32 %v425, %v468
    %v479 = vadd.f32 %v430, %v468
    %v480 = vadd.f32 %v435, %v468
    %v481 = vadd.f32 %v440, %v468
    %v482 = vadd.f32 %v445, %v468
    %v483 = vadd.f32 %v450, %v468
    %v484 = vadd.f32 %v455, %v468
    %v485 = vadd.f32 %v460, %v468
    %v486 = vmax.f32 %v470, 0.0
    %v487 = vmax.f32 %v471, 0.0
    %v488 = vmax.f32 %v472, 0.0
    %v489 = vmax.f32 %v473, 0.0
    %v490 = vmax.f32 %v474, 0.0
    %v491 = vmax.f32 %v475, 0.0
    %v492 = vmax.f32 %v476, 0.0
    %v493 = vmax.f32 %v477, 0.0
    %v494 = vmax.f32 %v478, 0.0
    %v495 = vmax.f32 %v479, 0.0
    %v496 = vmax.f32 %v480, 0.0
    %v497 = vmax.f32 %v481, 0.0
    %v498 = vmax.f32 %v482, 0.0
    %v499 = vmax.f32 %v483, 0.0
    %v500 = vmax.f32 %v484, 0.0
    %v501 = vmax.f32 %v485, 0.0
    %v502 = vld [vmem:[%s5] sm:$0x1]
    %v504 = vlaneseq
    %v505 = vshrl.u32 %v504, 7
    %v506 = vsub.s32 0, %v505
    %v507 = vrot.slane %v502, %v506
    %v509 = vmul.f32 %v486, %v507
    %v510 = vmul.f32 %v487, %v507
    %v511 = vmul.f32 %v488, %v507
    %v512 = vmul.f32 %v489, %v507
    %v513 = vmul.f32 %v490, %v507
    %v514 = vmul.f32 %v491, %v507
    %v515 = vmul.f32 %v492, %v507
    %v516 = vmul.f32 %v493, %v507
    %v517 = vmul.f32 %v494, %v507
    %v518 = vmul.f32 %v495, %v507
    %v519 = vmul.f32 %v496, %v507
    %v520 = vmul.f32 %v497, %v507
    %v521 = vmul.f32 %v498, %v507
    %v522 = vmul.f32 %v499, %v507
    %v523 = vmul.f32 %v500, %v507
    %v524 = vmul.f32 %v501, %v507
    %525 = vadd.xlane.f32.xlu0 %v509
    %v526 = vpop.xlane.xlu0 %525
    %527 = vadd.xlane.f32.xlu0 %v510
    %v528 = vpop.xlane.xlu0 %527
    %529 = vadd.xlane.f32.xlu0 %v511
    %v530 = vpop.xlane.xlu0 %529
    %531 = vadd.xlane.f32.xlu0 %v512
    %v532 = vpop.xlane.xlu0 %531
    %533 = vadd.xlane.f32.xlu0 %v513
    %v534 = vpop.xlane.xlu0 %533
    %535 = vadd.xlane.f32.xlu0 %v514
    %v536 = vpop.xlane.xlu0 %535
    %537 = vadd.xlane.f32.xlu0 %v515
    %v538 = vpop.xlane.xlu0 %537
    %539 = vadd.xlane.f32.xlu0 %v516
    %v540 = vpop.xlane.xlu0 %539
    %541 = vadd.xlane.f32.xlu0 %v517
    %v542 = vpop.xlane.xlu0 %541
    %543 = vadd.xlane.f32.xlu0 %v518
    %v544 = vpop.xlane.xlu0 %543
    %545 = vadd.xlane.f32.xlu0 %v519
    %v546 = vpop.xlane.xlu0 %545
    %547 = vadd.xlane.f32.xlu0 %v520
    %v548 = vpop.xlane.xlu0 %547
    %549 = vadd.xlane.f32.xlu0 %v521
    %v550 = vpop.xlane.xlu0 %549
    %551 = vadd.xlane.f32.xlu0 %v522
    %v552 = vpop.xlane.xlu0 %551
    %553 = vadd.xlane.f32.xlu0 %v523
    %v554 = vpop.xlane.xlu0 %553
    %555 = vadd.xlane.f32.xlu0 %v524
    %v556 = vpop.xlane.xlu0 %555
    %s557 = sld [smem:[#allocation2]]
    %v558 = vstv %s557
    %v559 = vadd.f32 %v526, %v558
    %v560 = vadd.f32 %v528, %v558
    %v561 = vadd.f32 %v530, %v558
    %v562 = vadd.f32 %v532, %v558
    %v563 = vadd.f32 %v534, %v558
    %v564 = vadd.f32 %v536, %v558
    %v565 = vadd.f32 %v538, %v558
    %v566 = vadd.f32 %v540, %v558
    %v567 = vadd.f32 %v542, %v558
    %v568 = vadd.f32 %v544, %v558
    %v569 = vadd.f32 %v546, %v558
    %v570 = vadd.f32 %v548, %v558
    %v571 = vadd.f32 %v550, %v558
    %v572 = vadd.f32 %v552, %v558
    %v573 = vadd.f32 %v554, %v558
    %v574 = vadd.f32 %v556, %v558
    %v591 = vlaneseq
    %v592 = vand.u32 %v591, 127
    %v593 = vlaneseq
    %v594 = vshrl.u32 %v593, 7
    %v595 = vsub.s32 %v592, %v594
    %v596 = vrot.slane %v559, %v595
    %v597 = vadd.s32 %v592, 4294967288
    %v598 = vlaneseq
    %v599 = vshrl.u32 %v598, 7
    %v600 = vsub.s32 %v597, %v599
    %v601 = vrot.slane %v560, %v600
    %vm602 = vcmask 130112
    %v603 = vsel %vm602, %v601, %v596
    %v604 = vadd.s32 %v592, 4294967280
    %v605 = vlaneseq
    %v606 = vshrl.u32 %v605, 7
    %v607 = vsub.s32 %v604, %v606
    %v608 = vrot.slane %v561, %v607
    %vm609 = vcmask 195712
    %v610 = vsel %vm609, %v608, %v603
    %v611 = vadd.s32 %v592, 4294967272
    %v612 = vlaneseq
    %v613 = vshrl.u32 %v612, 7
    %v614 = vsub.s32 %v611, %v613
    %v615 = vrot.slane %v562, %v614
    %vm616 = vcmask 261312
    %v617 = vsel %vm616, %v615, %v610
    %v618 = vadd.s32 %v592, 4294967264
    %v619 = vlaneseq
    %v620 = vshrl.u32 %v619, 7
    %v621 = vsub.s32 %v618, %v620
    %v622 = vrot.slane %v563, %v621
    %vm623 = vcmask 326912
    %v624 = vsel %vm623, %v622, %v617
    %v625 = vadd.s32 %v592, 4294967256
    %v626 = vlaneseq
    %v627 = vshrl.u32 %v626, 7
    %v628 = vsub.s32 %v625, %v627
    %v629 = vrot.slane %v564, %v628
    %vm630 = vcmask 392512
    %v631 = vsel %vm630, %v629, %v624
    %v632 = vadd.s32 %v592, 4294967248
    %v633 = vlaneseq
    %v634 = vshrl.u32 %v633, 7
    %v635 = vsub.s32 %v632, %v634
    %v636 = vrot.slane %v565, %v635
    %vm637 = vcmask 458112
    %v638 = vsel %vm637, %v636, %v631
    %v639 = vadd.s32 %v592, 4294967240
    %v640 = vlaneseq
    %v641 = vshrl.u32 %v640, 7
    %v642 = vsub.s32 %v639, %v641
    %v643 = vrot.slane %v566, %v642
    %vm644 = vcmask 523712
    %v645 = vsel %vm644, %v643, %v638
    %v646 = vadd.s32 %v592, 4294967232
    %v647 = vlaneseq
    %v648 = vshrl.u32 %v647, 7
    %v649 = vsub.s32 %v646, %v648
    %v650 = vrot.slane %v567, %v649
    %vm651 = vcmask 589312
    %v652 = vsel %vm651, %v650, %v645
    %v653 = vadd.s32 %v592, 4294967224
    %v654 = vlaneseq
    %v655 = vshrl.u32 %v654, 7
    %v656 = vsub.s32 %v653, %v655
    %v657 = vrot.slane %v568, %v656
    %vm658 = vcmask 654912
    %v659 = vsel %vm658, %v657, %v652
    %v660 = vadd.s32 %v592, 4294967216
    %v661 = vlaneseq
    %v662 = vshrl.u32 %v661, 7
    %v663 = vsub.s32 %v660, %v662
    %v664 = vrot.slane %v569, %v663
    %vm665 = vcmask 720512
    %v666 = vsel %vm665, %v664, %v659
    %v667 = vadd.s32 %v592, 4294967208
    %v668 = vlaneseq
    %v669 = vshrl.u32 %v668, 7
    %v670 = vsub.s32 %v667, %v669
    %v671 = vrot.slane %v570, %v670
    %vm672 = vcmask 786112
    %v673 = vsel %vm672, %v671, %v666
    %v674 = vadd.s32 %v592, 4294967200
    %v675 = vlaneseq
    %v676 = vshrl.u32 %v675, 7
    %v677 = vsub.s32 %v674, %v676
    %v678 = vrot.slane %v571, %v677
    %vm679 = vcmask 851712
    %v680 = vsel %vm679, %v678, %v673
    %v681 = vadd.s32 %v592, 4294967192
    %v682 = vlaneseq
    %v683 = vshrl.u32 %v682, 7
    %v684 = vsub.s32 %v681, %v683
    %v685 = vrot.slane %v572, %v684
    %vm686 = vcmask 917312
    %v687 = vsel %vm686, %v685, %v680
    %v688 = vadd.s32 %v592, 4294967184
    %v689 = vlaneseq
    %v690 = vshrl.u32 %v689, 7
    %v691 = vsub.s32 %v688, %v690
    %v692 = vrot.slane %v573, %v691
    %vm693 = vcmask 982912
    %v694 = vsel %vm693, %v692, %v687
    %v695 = vadd.s32 %v592, 4294967176
    %v696 = vlaneseq
    %v697 = vshrl.u32 %v696, 7
    %v698 = vsub.s32 %v695, %v697
    %v699 = vrot.slane %v574, %v698
    %vm700 = vcmask 1048512
    %v701 = vsel %vm700, %v699, %v694
    %703 = vst [vmem:[#allocation3] sm:$0x1] %v701
    // Predicated region
    $region30: #{tpu_custom_call.1} parent=1 // pred_check
      _
    $region31: #{tpu_custom_call.1} parent=1 // pred_check_branch
      %705 = sbr.rel (0) target = $region33
    $region32: #{tpu_custom_call.1} parent=1 // pred_region
      %s707 = ssub.s32 16, 16
      %708 = vsyncadd [#allocation4], %s707
      %s710 = sshll.u32 [#allocation3], 4
      %s711 = int_to_ptr.vmem [resolvable:$true] %s710
      %713 = dma.vmem_to_hbm [thread:$0]  %s711, 16, %s7, [#allocation4]
    $region33: #{tpu_custom_call.1} parent=1 // pred_fallthru
      _
    // Predicated region
    $region34: #{tpu_custom_call.1} parent=1 // pred_check
      _
    $region35: #{tpu_custom_call.1} parent=1 // pred_check_branch
      %715 = sbr.rel (0) target = $region37
    $region36: #{tpu_custom_call.1} parent=1 // pred_region
      %716 = dma.done [#allocation4], 16
    $region37: #{tpu_custom_call.1} parent=1 // pred_fallthru
      _
    %717 = vsyncpa [#allocation4], 1

</llo_original>
